<compile_context>
chip_gen: v7x
topology: tpu7x:2x2x1
jax: 0.10.0
libtpu: 0.0.40
codegen_flags: <defaults>
</compile_context>

<pallas_src>
import math
from functools import partial

import jax
import jax.numpy as jnp
from jax.experimental import pallas as pl
from jax.experimental.pallas import tpu as pltpu


# ---------------------------------------------------------------------------
# Filter construction (glue, plain JAX).  The torch filters are real-valued
# numbers cast to complex64, so complex multiplication == real multiplication.
# ---------------------------------------------------------------------------
PI = math.pi


def high_filter(r):
    mask = (r > PI / 4) & (r < PI / 2)
    cos_term = jnp.cos(PI / 2 * (jnp.log(2.0 * r / PI) / jnp.log(jnp.float32(2.0))))
    return (r >= PI / 2).astype(jnp.float32) + mask.astype(jnp.float32) * cos_term


def low_filter(r):
    mask = (r > PI / 4) & (r < PI / 2)
    cos_term = jnp.cos(PI / 2 * (jnp.log(4.0 * r / PI) / jnp.log(jnp.float32(2.0))))
    return (r <= PI / 4).astype(jnp.float32) + mask.astype(jnp.float32) * cos_term


def steer_filter(t, k, n):
    alpha = 2 ** (n - 1) * math.factorial(n - 1) / (n * math.factorial(2 * (n - 1))) ** 0.5
    ind = (jnp.abs(jnp.mod(t + PI - PI * k / n, 2 * PI) - PI) < PI / 2).astype(jnp.float32)
    return (alpha * jnp.cos(t - PI * k / n) ** (n - 1) * ind).astype(jnp.float32)


def make_band_filters(n_i_, n_j_, n_ori, is_first):
    """Build the stacked per-band (real) filters, shape (n_bands, H, W)."""
    l_y = jnp.linspace((-n_i_) // 2, n_i_ // 2 - 1, n_i_, dtype=jnp.float32)
    l_x = jnp.linspace((-n_j_) // 2, n_j_ // 2 - 1, n_j_, dtype=jnp.float32)
    # torch.meshgrid(l_x, l_y, indexing='xy') -> shape (len(l_y), len(l_x)) = (H, W)
    x, y = jnp.meshgrid(l_x, l_y, indexing="xy")
    r = jnp.sqrt((x * 2 * PI / n_j_) ** 2 + (y * 2 * PI / n_i_) ** 2)
    th = jnp.arctan2(y, x)
    r = r.at[n_i_ // 2, n_j_ // 2].set(1e-15)

    f_l = low_filter(r)
    f_h = high_filter(r)
    f_ori = [steer_filter(th, k, n_ori) for k in range(n_ori)]

    bands = []
    if is_first:
        f_l0 = low_filter(r / 2)
        f_h0 = high_filter(r / 2)
        bands.append(f_h0)                                  # band 0: h0 * input
        for k in range(n_ori):
            bands.append(2.0 * f_ori[k] * f_h * f_l0)       # oriented bands on low = l0*input
        bands.append(f_l * f_l0)                            # residual low
    else:
        for k in range(n_ori):
            bands.append(2.0 * f_ori[k] * f_h)              # oriented bands
        bands.append(f_l)                                   # residual low
    return jnp.stack(bands, axis=0).astype(jnp.float32)     # (n_bands, H, W)


# ---------------------------------------------------------------------------
# Pallas kernel: all bands of one (BC-tile, lane-tile) are produced in a single
# grid step with a broadcast multiply.  Output is written directly in the
# module's channel-major order (BC, n_bands, L) so no transpose is needed
# downstream.
# ---------------------------------------------------------------------------
def band_multiply_kernel(x_ref, f_ref, o_ref):
    x = x_ref[...]                                   # (bc_t, l_t)
    f = f_ref[...]                                   # (n_bands, l_t)
    o_ref[...] = x[:, None, :] * f[None, :, :]       # (bc_t, n_bands, l_t)


def _choose_tiles(bc, L, n_bands, budget_bytes=4 * 1024 * 1024):
    """Pick (bc_tile, lane_tile).  Prefer the full lane extent L (fully
    contiguous per-BC output slabs) and shrink the BC tile first; only tile the
    lane axis if a single BC-tile row still exceeds the per-step VMEM budget.
    Budget is chosen so 2x (double-buffered) fits scoped VMEM everywhere."""
    nb_pad = -(-n_bands // 8) * 8   # output block pads n_bands to 8 sublanes in VMEM

    def step_bytes(bt, lt):
        return 4 * (bt * lt + n_bands * lt + bt * nb_pad * lt)

    # Small problems: one grid step, whole arrays resident, zero per-step
    # overhead (this is the path taken for e.g. 2x4x16x16).
    if step_bytes(bc, L) <= budget_bytes:
        return bc, L

    # Shrink the BC tile while it stays a multiple of 8 (keeps the (8,128)
    # constraint on the 2-D input block legal) and full-L output slabs fit.
    bc_t = bc
    while step_bytes(bc_t, L) > budget_bytes and bc_t % 16 == 0:
        bc_t //= 2
    if step_bytes(bc_t, L) <= budget_bytes:
        return bc_t, L

    # Otherwise tile the lane axis with the largest multiple of 128 that both
    # divides L and fits the budget.
    l_t = L
    for cand in (65536, 32768, 16384, 8192, 4096, 2048, 1024, 512, 256, 128):
        if L % cand == 0 and step_bytes(bc_t, cand) <= budget_bytes:
            l_t = cand
            break
    return bc_t, l_t


def pallas_band_multiply(xf, band_filters_flat):
    """xf: (BC, L) float32; band_filters_flat: (n_bands, L) float32.
    Returns (BC, n_bands, L) float32 (channel-major: matches module layout)."""
    bc, L = xf.shape
    n_bands = band_filters_flat.shape[0]
    bc_t, l_t = _choose_tiles(bc, L, n_bands)
    grid = (bc // bc_t, L // l_t)

    grid_spec = pltpu.PrefetchScalarGridSpec(
        num_scalar_prefetch=0,
        grid=grid,
        in_specs=[
            pl.BlockSpec((bc_t, l_t), lambda i, j: (i, j)),          # input tile
            pl.BlockSpec((n_bands, l_t), lambda i, j: (0, j)),       # all bands' filters
        ],
        out_specs=pl.BlockSpec((bc_t, n_bands, l_t), lambda i, j: (i, 0, j)),
    )

    return pl.pallas_call(
        band_multiply_kernel,
        out_shape=jax.ShapeDtypeStruct((bc, n_bands, L), jnp.float32),
        grid_spec=grid_spec,
        compiler_params=pltpu.CompilerParams(
            dimension_semantics=("parallel", "parallel"),
        ),
    )(xf, band_filters_flat)


# ---------------------------------------------------------------------------
# Forward wrapper matching LayerSteerablePyramid.forward semantics.
# ---------------------------------------------------------------------------
def layer_steerable_pyramid_forward(
    x,                      # (n_b, n_c, H, W) complex64 or real float
    *,
    n_i=16, n_j=16, scale=0, n_ori=4,
    is_first=False, real=False, up_sampled=False, fourier=False, double_phase=False,
):
    if real and fourier:
        raise ValueError("real and fourier cannot be simultaneously true")
    n_i_ = n_i // 2 ** scale
    n_j_ = n_j // 2 ** scale
    n_b, n_c, h, w = x.shape
    assert (h, w) == (n_i_, n_j_)
    bc = n_b * n_c

    filters = make_band_filters(n_i_, n_j_, n_ori, is_first)       # (n_bands, H, W)
    n_bands = filters.shape[0]
    f_flat = filters.reshape(n_bands, h * w)                        # (n_bands, H*W)

    if jnp.iscomplexobj(x):
        # Interleaved re/im float32 layout: (BC, 2*H*W).  One fused pass builds
        # it; the filter is repeated 2x along the lane axis to match.
        xc = x.astype(jnp.complex64)
        xf = jnp.stack([jnp.real(xc), jnp.imag(xc)], axis=-1)       # (n_b,n_c,H,W,2)
        xf = xf.reshape(bc, 2 * h * w).astype(jnp.float32)
        f_in = jnp.repeat(f_flat, 2, axis=-1)                       # (n_bands, 2*H*W)

        out = pallas_band_multiply(xf, f_in)                        # (BC, n_bands, 2*H*W)
        out = out.reshape(n_b, n_c, n_bands, h, w, 2)
        out_c = jax.lax.complex(out[..., 0], out[..., 1])           # (n_b,n_c,n_bands,H,W) c64
    else:
        # Real-input fast path: skip the imaginary plane entirely inside Pallas.
        xf = x.reshape(bc, h * w).astype(jnp.float32)
        out = pallas_band_multiply(xf, f_flat)                      # (BC, n_bands, H*W)
        out_c = out.reshape(n_b, n_c, n_bands, h, w)                # real; ifft2 promotes

    if up_sampled and not is_first:
        pad_i = (n_i - n_i_) // 2
        pad_j = (n_j - n_j_) // 2
        out_c = jnp.pad(out_c, ((0, 0), (0, 0), (0, 0), (pad_i, pad_i), (pad_j, pad_j)))

    if not fourier:
        # TODO(synk): FFT has no Pallas equivalent; done with jnp.fft (matches torch ifft2∘ifftshift).
        out_c = jnp.fft.ifft2(jnp.fft.ifftshift(out_c, axes=(-2, -1)), axes=(-2, -1)).astype(jnp.complex64)
        if double_phase and up_sampled and not is_first:
            r = jnp.abs(out_c)
            theta = jnp.angle(out_c)
            out_c = (r * jnp.exp(1j * (2 ** scale) * theta)).astype(jnp.complex64)
    else:
        out_c = out_c.astype(jnp.complex64)

    if real:
        out_c = jnp.real(out_c)
    return out_c                                                    # (n_b,n_c,n_bands,H',W')


# Pure-JAX reference (no Pallas) for numerical verification.
def reference_forward(x, *, n_i, n_j, scale, n_ori, is_first, fourier):
    n_i_ = n_i // 2 ** scale
    n_j_ = n_j // 2 ** scale
    band_filters = make_band_filters(n_i_, n_j_, n_ori, is_first).astype(jnp.complex64)
    out = band_filters[None, None] * x.astype(jnp.complex64)[:, :, None]
    if not fourier:
        out = jnp.fft.ifft2(jnp.fft.ifftshift(out, axes=(-2, -1)), axes=(-2, -1)).astype(jnp.complex64)
    return out


if __name__ == "__main__":
    # Small deterministic example consistent with the module: NCHW complex input.
    n_b, n_c, H, W = 2, 4, 16, 16
    n_ori, scale = 4, 0

    key = jax.random.PRNGKey(0)
    k_re, k_im = jax.random.split(key)
    x_re = jax.random.normal(k_re, (n_b, n_c, H, W), dtype=jnp.float32)
    x_im = jax.random.normal(k_im, (n_b, n_c, H, W), dtype=jnp.float32)
    x = (x_re + 1j * x_im).astype(jnp.complex64)

    fwd = jax.jit(partial(
        layer_steerable_pyramid_forward,
        n_i=H, n_j=W, scale=scale, n_ori=n_ori,
        is_first=False, real=False, up_sampled=False, fourier=False, double_phase=False,
    ))

    # Complex-input path.
    out = jax.block_until_ready(fwd(x))
    ref = reference_forward(x, n_i=H, n_j=W, scale=scale, n_ori=n_ori,
                            is_first=False, fourier=False)
    assert out.shape == (n_b, n_c, n_ori + 1, H, W), out.shape
    assert out.dtype == jnp.complex64, out.dtype
    max_err = float(jnp.max(jnp.abs(out - ref)))
    assert max_err < 1e-5, f"max abs error {max_err}"

    # Real-input fast path (half the HBM traffic in the Pallas stage).
    out_r = jax.block_until_ready(fwd(x_re))
    ref_r = reference_forward(x_re, n_i=H, n_j=W, scale=scale, n_ori=n_ori,
                              is_first=False, fourier=False)
    max_err_r = float(jnp.max(jnp.abs(out_r - ref_r)))
    assert max_err_r < 1e-5, f"max abs error (real path) {max_err_r}"

    # is_first + Fourier-domain output path (n_ori + 2 bands, no inverse FFT).
    fwd_first = jax.jit(partial(
        layer_steerable_pyramid_forward,
        n_i=H, n_j=W, scale=scale, n_ori=n_ori,
        is_first=True, real=False, up_sampled=False, fourier=True, double_phase=False,
    ))
    out_f = jax.block_until_ready(fwd_first(x))
    ref_f = reference_forward(x, n_i=H, n_j=W, scale=scale, n_ori=n_ori,
                              is_first=True, fourier=True)
    assert out_f.shape == (n_b, n_c, n_ori + 2, H, W), out_f.shape
    max_err_f = float(jnp.max(jnp.abs(out_f - ref_f)))
    assert max_err_f < 1e-5, f"max abs error (is_first/fourier path) {max_err_f}"

    print("KERNEL_OK")
</pallas_src>

<mosaic_0001>
module attributes {stable_mosaic.version = 11 : i64} {
  func.func @band_multiply_kernel(%arg0: i32, %arg1: i32, %arg2: memref<8x512xf32, #tpu.memory_space<vmem>>, %arg3: memref<5x512xf32, #tpu.memory_space<vmem>>, %arg4: memref<8x5x512xf32, #tpu.memory_space<vmem>>) attributes {dimension_semantics = [#tpu.dimension_semantics<parallel>, #tpu.dimension_semantics<parallel>], iteration_bounds = array<i64: 1, 1>, scalar_prefetch = 0 : i64, scratch_operands = 0 : i64, tpu.core_type = #tpu.core_type<tc>, window_params = [{transform_indices = @transform_0, window_bounds = array<i64: 8, 512>}, {transform_indices = @transform_1, window_bounds = array<i64: 5, 512>}, {transform_indices = @transform_2, window_bounds = array<i64: 8, 5, 512>}]} {
    %c0 = arith.constant 0 : index
    %c0_0 = arith.constant 0 : index
    %0 = vector.load %arg2[%c0, %c0_0] : memref<8x512xf32, #tpu.memory_space<vmem>>, vector<8x512xf32>
    %c0_1 = arith.constant 0 : index
    %c0_2 = arith.constant 0 : index
    %1 = vector.load %arg3[%c0_1, %c0_2] : memref<5x512xf32, #tpu.memory_space<vmem>>, vector<5x512xf32>
    %2 = vector.shape_cast %0 : vector<8x512xf32> to vector<8x1x512xf32>
    %3 = vector.shape_cast %1 : vector<5x512xf32> to vector<1x5x512xf32>
    %4 = vector.broadcast %2 : vector<8x1x512xf32> to vector<8x5x512xf32>
    %5 = vector.broadcast %3 : vector<1x5x512xf32> to vector<8x5x512xf32>
    %6 = arith.mulf %4, %5 : vector<8x5x512xf32>
    %c0_3 = arith.constant 0 : index
    %c0_4 = arith.constant 0 : index
    %c0_5 = arith.constant 0 : index
    %7 = vector.load %arg4[%c0_3, %c0_4, %c0_5] : memref<8x5x512xf32, #tpu.memory_space<vmem>>, vector<8x5x512xf32>
    tpu.vector_store %arg4[%c0_3, %c0_4, %c0_5], %6 {strides = array<i32>} : memref<8x5x512xf32, #tpu.memory_space<vmem>>, vector<8x5x512xf32>,
    return
  }
  func.func @transform_0(%arg0: i32, %arg1: i32) -> (i32, i32) {
    %c0_i32 = arith.constant 0 : i32
    return %arg0, %arg1 : i32, i32
  }
  func.func @transform_1(%arg0: i32, %arg1: i32) -> (i32, i32) {
    %c0_i32 = arith.constant 0 : i32
    %c0_i32_0 = arith.constant 0 : i32
    return %c0_i32, %arg1 : i32, i32
  }
  func.func @transform_2(%arg0: i32, %arg1: i32) -> (i32, i32, i32) {
    %c0_i32 = arith.constant 0 : i32
    %c0_i32_0 = arith.constant 0 : i32
    return %arg0, %c0_i32, %arg1 : i32, i32, i32
  }
}

</mosaic_0001>

<llo_original>
// kernel: custom-call.1
$region0: #{custom-call.1}
  %s0 = inlined_call_operand.hbm [shape: c64[2,4,16,16], index: 0, kind: input, shape index: {}]
  %s1 = inlined_call_operand.vmem [shape: f32[2,4,16,16], index: 1, kind: output, shape index: {}]
  %s2 = scalar_lea.hbm %s0, 2048
  $region1: #{custom-call.1} parent=0
    #allocation0 [shape = 's32[1]{0}', space=sflag, size = 0x4, scoped, tag = 'scoped memory for custom-call.1']
    %3 = vsyncpa [#allocation0], 0
    %s4 = sshll.u32 %s1, 4
    %s5 = int_to_ptr.vmem [resolvable:$true] %s4
    %7 = dma.hbm_to_vmem [thread:$0]  %s2, 2048, %s5, [#allocation0]
    %8 = dma.done [#allocation0], 2048
    %9 = vsyncpa [#allocation0], 1

// kernel: custom-call
$region0: #{custom-call}
  %s0 = inlined_call_operand.hbm [shape: c64[2,4,16,16], index: 0, kind: input, shape index: {}]
  %s1 = inlined_call_operand.vmem [shape: f32[2,4,16,16], index: 1, kind: output, shape index: {}]
  $region1: #{custom-call} parent=0
    #allocation0 [shape = 's32[1]{0}', space=sflag, size = 0x4, scoped, tag = 'scoped memory for custom-call']
    %2 = vsyncpa [#allocation0], 0
    %s3 = sshll.u32 %s1, 4
    %s4 = int_to_ptr.vmem [resolvable:$true] %s3
    %6 = dma.hbm_to_vmem [thread:$0]  %s0, 2048, %s4, [#allocation0]
    %7 = dma.done [#allocation0], 2048
    %8 = vsyncpa [#allocation0], 1

// kernel: layer_steerable_pyramid_forward.1
$region0: #{layer_steerable_pyramid_forward.1}
  #allocation0 [shape = 'u32[]', space=smem, size = 0x4, offset = 0x4, fixed_abs, tag = 'smem constant byte address 0x4 - core index']
  #allocation1 [shape = 'u32[144,128]{1,0:T(1,128)}', space=vmem, size = 0x12000, scoped, tag = 'internal scratch']
  %s0 = inlined_call_operand.vmem [shape: f32[8,512], index: 0, kind: input, shape index: {}]
  %s1 = inlined_call_operand.vmem [shape: f32[5,512], index: 1, kind: input, shape index: {}]
  %s2 = inlined_call_operand.vmem [shape: f32[8,5,512], index: 2, kind: output, shape index: {}]
  %s3 = sld [smem:[#allocation0]]
  $region18: #{layer_steerable_pyramid_forward.1} parent=0
    _
  %s5 = ssub.s32 1, %s3
  %s6 = scalar_select 0, %s5, %s3
  // Predicated region
  $region2: #{layer_steerable_pyramid_forward.1} parent=0 // pred_check
    _
  $region3: #{layer_steerable_pyramid_forward.1} parent=0 // pred_check_branch
    %8 = sbr.rel (0) target = $region5
  $region4: #{layer_steerable_pyramid_forward.1} parent=0 // pred_region
    _
  $region5: #{layer_steerable_pyramid_forward.1} parent=0 // pred_fallthru
    _
  // Predicated region
  $region6: #{layer_steerable_pyramid_forward.1} parent=0 // pred_check
    _
  $region7: #{layer_steerable_pyramid_forward.1} parent=0 // pred_check_branch
    %10 = sbr.rel (0) target = $region9
  $region8: #{layer_steerable_pyramid_forward.1} parent=0 // pred_region
    _
  $region9: #{layer_steerable_pyramid_forward.1} parent=0 // pred_fallthru
    _
  %v11 = vld [vmem:[%s0] sm:$0xff]
  %v12 = vld [vmem:[%s0 + $0x8] sm:$0xff]
  %v13 = vld [vmem:[%s0 + $0x10] sm:$0xff]
  %v14 = vld [vmem:[%s0 + $0x18] sm:$0xff]
  %v15 = vld [vmem:[%s1] sm:$0x1f]
  %v16 = vld [vmem:[%s1 + $0x8] sm:$0x1f]
  %v17 = vld [vmem:[%s1 + $0x10] sm:$0x1f]
  %v18 = vld [vmem:[%s1 + $0x18] sm:$0x1f]
  %v23 = vcombine.low %v11, %v12
  %v24 = vcombine.high %v11, %v12
  %v25 = vcombine.low %v13, %v14
  %v26 = vcombine.high %v13, %v14
  %v28 = vunpack.c.l.s4 1966171168
  %v29 = vunpack.c.0.s8 %v28
  %v30 = vlaneseq
  %v31 = vshrl.u32 %v30, 7
  %v32 = vsub.s32 %v29, %v31
  %v33 = vrot.slane %v23, %v32
  %v35 = vunpack.c.l.s4 1966171168
  %v36 = vunpack.c.0.s8 %v35
  %v37 = vlaneseq
  %v38 = vshrl.u32 %v37, 7
  %v39 = vsub.s32 %v36, %v38
  %v40 = vrot.slane %v24, %v39
  %v42 = vunpack.c.l.s4 1966171168
  %v43 = vunpack.c.0.s8 %v42
  %v44 = vlaneseq
  %v45 = vshrl.u32 %v44, 7
  %v46 = vsub.s32 %v43, %v45
  %v47 = vrot.slane %v25, %v46
  %v49 = vunpack.c.l.s4 1966171168
  %v50 = vunpack.c.0.s8 %v49
  %v51 = vlaneseq
  %v52 = vshrl.u32 %v51, 7
  %v53 = vsub.s32 %v50, %v52
  %v54 = vrot.slane %v26, %v53
  %v55 = vcombine.low %v33, %v47
  %v56 = vcombine.high %v33, %v47
  %v57 = vcombine.low %v40, %v54
  %v58 = vcombine.high %v40, %v54
  %v60 = vunpack.c.l.s4 1966171168
  %v61 = vunpack.c.0.s8 %v60
  %v62 = vlaneseq
  %v63 = vshrl.u32 %v62, 7
  %v64 = vsub.s32 %v61, %v63
  %v65 = vrot.slane %v55, %v64
  %v67 = vunpack.c.l.s4 1966171168
  %v68 = vunpack.c.0.s8 %v67
  %v69 = vlaneseq
  %v70 = vshrl.u32 %v69, 7
  %v71 = vsub.s32 %v68, %v70
  %v72 = vrot.slane %v57, %v71
  %v74 = vunpack.c.l.s4 1966171168
  %v75 = vunpack.c.0.s8 %v74
  %v76 = vlaneseq
  %v77 = vshrl.u32 %v76, 7
  %v78 = vsub.s32 %v75, %v77
  %v79 = vrot.slane %v56, %v78
  %v81 = vunpack.c.l.s4 1966171168
  %v82 = vunpack.c.0.s8 %v81
  %v83 = vlaneseq
  %v84 = vshrl.u32 %v83, 7
  %v85 = vsub.s32 %v82, %v84
  %v86 = vrot.slane %v58, %v85
  %v87 = vcombine.high %v65, %v65
  %v88 = vcombine.high %v72, %v72
  %v89 = vcombine.high %v79, %v79
  %v90 = vcombine.high %v86, %v86
  %v91 = vlaneseq
  %v92 = vshrl.u32 %v91, 7
  %v93 = vsub.s32 0, %v92
  %v94 = vrot.slane %v65, %v93
  %v95 = vlaneseq
  %v96 = vshrl.u32 %v95, 7
  %v97 = vsub.s32 1, %v96
  %v98 = vrot.slane %v65, %v97
  %v99 = vlaneseq
  %v100 = vshrl.u32 %v99, 7
  %v101 = vsub.s32 2, %v100
  %v102 = vrot.slane %v65, %v101
  %v103 = vlaneseq
  %v104 = vshrl.u32 %v103, 7
  %v105 = vsub.s32 3, %v104
  %v106 = vrot.slane %v65, %v105
  %v107 = vlaneseq
  %v108 = vshrl.u32 %v107, 7
  %v109 = vsub.s32 0, %v108
  %v110 = vrot.slane %v79, %v109
  %v111 = vlaneseq
  %v112 = vshrl.u32 %v111, 7
  %v113 = vsub.s32 1, %v112
  %v114 = vrot.slane %v79, %v113
  %v115 = vlaneseq
  %v116 = vshrl.u32 %v115, 7
  %v117 = vsub.s32 2, %v116
  %v118 = vrot.slane %v79, %v117
  %v119 = vlaneseq
  %v120 = vshrl.u32 %v119, 7
  %v121 = vsub.s32 3, %v120
  %v122 = vrot.slane %v79, %v121
  %v123 = vlaneseq
  %v124 = vshrl.u32 %v123, 7
  %v125 = vsub.s32 0, %v124
  %v126 = vrot.slane %v87, %v125
  %v127 = vlaneseq
  %v128 = vshrl.u32 %v127, 7
  %v129 = vsub.s32 1, %v128
  %v130 = vrot.slane %v87, %v129
  %v131 = vlaneseq
  %v132 = vshrl.u32 %v131, 7
  %v133 = vsub.s32 2, %v132
  %v134 = vrot.slane %v87, %v133
  %v135 = vlaneseq
  %v136 = vshrl.u32 %v135, 7
  %v137 = vsub.s32 3, %v136
  %v138 = vrot.slane %v87, %v137
  %v139 = vlaneseq
  %v140 = vshrl.u32 %v139, 7
  %v141 = vsub.s32 0, %v140
  %v142 = vrot.slane %v89, %v141
  %v143 = vlaneseq
  %v144 = vshrl.u32 %v143, 7
  %v145 = vsub.s32 1, %v144
  %v146 = vrot.slane %v89, %v145
  %v147 = vlaneseq
  %v148 = vshrl.u32 %v147, 7
  %v149 = vsub.s32 2, %v148
  %v150 = vrot.slane %v89, %v149
  %v151 = vlaneseq
  %v152 = vshrl.u32 %v151, 7
  %v153 = vsub.s32 3, %v152
  %v154 = vrot.slane %v89, %v153
  %v155 = vlaneseq
  %v156 = vshrl.u32 %v155, 7
  %v157 = vsub.s32 0, %v156
  %v158 = vrot.slane %v72, %v157
  %v159 = vlaneseq
  %v160 = vshrl.u32 %v159, 7
  %v161 = vsub.s32 1, %v160
  %v162 = vrot.slane %v72, %v161
  %v163 = vlaneseq
  %v164 = vshrl.u32 %v163, 7
  %v165 = vsub.s32 2, %v164
  %v166 = vrot.slane %v72, %v165
  %v167 = vlaneseq
  %v168 = vshrl.u32 %v167, 7
  %v169 = vsub.s32 3, %v168
  %v170 = vrot.slane %v72, %v169
  %v171 = vlaneseq
  %v172 = vshrl.u32 %v171, 7
  %v173 = vsub.s32 0, %v172
  %v174 = vrot.slane %v86, %v173
  %v175 = vlaneseq
  %v176 = vshrl.u32 %v175, 7
  %v177 = vsub.s32 1, %v176
  %v178 = vrot.slane %v86, %v177
  %v179 = vlaneseq
  %v180 = vshrl.u32 %v179, 7
  %v181 = vsub.s32 2, %v180
  %v182 = vrot.slane %v86, %v181
  %v183 = vlaneseq
  %v184 = vshrl.u32 %v183, 7
  %v185 = vsub.s32 3, %v184
  %v186 = vrot.slane %v86, %v185
  %v187 = vlaneseq
  %v188 = vshrl.u32 %v187, 7
  %v189 = vsub.s32 0, %v188
  %v190 = vrot.slane %v88, %v189
  %v191 = vlaneseq
  %v192 = vshrl.u32 %v191, 7
  %v193 = vsub.s32 1, %v192
  %v194 = vrot.slane %v88, %v193
  %v195 = vlaneseq
  %v196 = vshrl.u32 %v195, 7
  %v197 = vsub.s32 2, %v196
  %v198 = vrot.slane %v88, %v197
  %v199 = vlaneseq
  %v200 = vshrl.u32 %v199, 7
  %v201 = vsub.s32 3, %v200
  %v202 = vrot.slane %v88, %v201
  %v203 = vlaneseq
  %v204 = vshrl.u32 %v203, 7
  %v205 = vsub.s32 0, %v204
  %v206 = vrot.slane %v90, %v205
  %v207 = vlaneseq
  %v208 = vshrl.u32 %v207, 7
  %v209 = vsub.s32 1, %v208
  %v210 = vrot.slane %v90, %v209
  %v211 = vlaneseq
  %v212 = vshrl.u32 %v211, 7
  %v213 = vsub.s32 2, %v212
  %v214 = vrot.slane %v90, %v213
  %v215 = vlaneseq
  %v216 = vshrl.u32 %v215, 7
  %v217 = vsub.s32 3, %v216
  %v218 = vrot.slane %v90, %v217
  %v251 = vmul.f32 %v94, %v15
  %v252 = vmul.f32 %v98, %v16
  %v253 = vmul.f32 %v102, %v17
  %v254 = vmul.f32 %v106, %v18
  %v255 = vmul.f32 %v110, %v15
  %v256 = vmul.f32 %v114, %v16
  %v257 = vmul.f32 %v118, %v17
  %v258 = vmul.f32 %v122, %v18
  %v259 = vmul.f32 %v126, %v15
  %v260 = vmul.f32 %v130, %v16
  %v261 = vmul.f32 %v134, %v17
  %v262 = vmul.f32 %v138, %v18
  %v263 = vmul.f32 %v142, %v15
  %v264 = vmul.f32 %v146, %v16
  %v265 = vmul.f32 %v150, %v17
  %v266 = vmul.f32 %v154, %v18
  %v267 = vmul.f32 %v158, %v15
  %v268 = vmul.f32 %v162, %v16
  %v269 = vmul.f32 %v166, %v17
  %v270 = vmul.f32 %v170, %v18
  %v271 = vmul.f32 %v174, %v15
  %v272 = vmul.f32 %v178, %v16
  %v273 = vmul.f32 %v182, %v17
  %v274 = vmul.f32 %v186, %v18
  %v275 = vmul.f32 %v190, %v15
  %v276 = vmul.f32 %v194, %v16
  %v277 = vmul.f32 %v198, %v17
  %v278 = vmul.f32 %v202, %v18
  %v279 = vmul.f32 %v206, %v15
  %v280 = vmul.f32 %v210, %v16
  %v281 = vmul.f32 %v214, %v17
  %v282 = vmul.f32 %v218, %v18
  %283 = vst [vmem:[%s2] sm:$0x1f] %v251
  %284 = vst [vmem:[%s2 + $0x8] sm:$0x1f] %v252
  %285 = vst [vmem:[%s2 + $0x10] sm:$0x1f] %v253
  %286 = vst [vmem:[%s2 + $0x18] sm:$0x1f] %v254
  %287 = vst [vmem:[%s2 + $0x20] sm:$0x1f] %v255
  %288 = vst [vmem:[%s2 + $0x28] sm:$0x1f] %v256
  %289 = vst [vmem:[%s2 + $0x30] sm:$0x1f] %v257
  %290 = vst [vmem:[%s2 + $0x38] sm:$0x1f] %v258
  %291 = vst [vmem:[%s2 + $0x40] sm:$0x1f] %v259
  %292 = vst [vmem:[%s2 + $0x48] sm:$0x1f] %v260
  %293 = vst [vmem:[%s2 + $0x50] sm:$0x1f] %v261
  %294 = vst [vmem:[%s2 + $0x58] sm:$0x1f] %v262
  %295 = vst [vmem:[%s2 + $0x60] sm:$0x1f] %v263
  %296 = vst [vmem:[%s2 + $0x68] sm:$0x1f] %v264
  %297 = vst [vmem:[%s2 + $0x70] sm:$0x1f] %v265
  %298 = vst [vmem:[%s2 + $0x78] sm:$0x1f] %v266
  %299 = vst [vmem:[%s2 + $0x80] sm:$0x1f] %v267
  %300 = vst [vmem:[%s2 + $0x88] sm:$0x1f] %v268
  %301 = vst [vmem:[%s2 + $0x90] sm:$0x1f] %v269
  %302 = vst [vmem:[%s2 + $0x98] sm:$0x1f] %v270
  %303 = vst [vmem:[%s2 + $0xa0] sm:$0x1f] %v271
  %304 = vst [vmem:[%s2 + $0xa8] sm:$0x1f] %v272
  %305 = vst [vmem:[%s2 + $0xb0] sm:$0x1f] %v273
  %306 = vst [vmem:[%s2 + $0xb8] sm:$0x1f] %v274
  %307 = vst [vmem:[%s2 + $0xc0] sm:$0x1f] %v275
  %308 = vst [vmem:[%s2 + $0xc8] sm:$0x1f] %v276
  %309 = vst [vmem:[%s2 + $0xd0] sm:$0x1f] %v277
  %310 = vst [vmem:[%s2 + $0xd8] sm:$0x1f] %v278
  %311 = vst [vmem:[%s2 + $0xe0] sm:$0x1f] %v279
  %312 = vst [vmem:[%s2 + $0xe8] sm:$0x1f] %v280
  %313 = vst [vmem:[%s2 + $0xf0] sm:$0x1f] %v281
  %314 = vst [vmem:[%s2 + $0xf8] sm:$0x1f] %v282
  // Predicated region
  $region10: #{layer_steerable_pyramid_forward.1} parent=0 // pred_check
    _
  $region11: #{layer_steerable_pyramid_forward.1} parent=0 // pred_check_branch
    %316 = sbr.rel (0) target = $region13
  $region12: #{layer_steerable_pyramid_forward.1} parent=0 // pred_region
    _
  $region13: #{layer_steerable_pyramid_forward.1} parent=0 // pred_fallthru
    _
  // Predicated region
  $region14: #{layer_steerable_pyramid_forward.1} parent=0 // pred_check
    _
  $region15: #{layer_steerable_pyramid_forward.1} parent=0 // pred_check_branch
    %318 = sbr.rel (0) target = $region17
  $region16: #{layer_steerable_pyramid_forward.1} parent=0 // pred_region
    _
  $region17: #{layer_steerable_pyramid_forward.1} parent=0 // pred_fallthru
    _

// kernel: custom-call.2
$region0: #{custom-call.2}
  %s0 = inlined_call_operand.vmem [shape: f32[2,4,5,16,16], index: 0, kind: input, shape index: {}]
  %s1 = inlined_call_operand.vmem [shape: f32[2,4,5,16,16], index: 1, kind: input, shape index: {}]
  %s2 = inlined_call_operand.vmem [shape: c64[2,4,5,16,16], index: 2, kind: output, shape index: {}]
  %s4 = scalar_lea.vmem %s2, 640
  %v5 = vld [vmem:[%s0] sm:$0xff]
  %6 = vst [vmem:[%s2] sm:$0xff] %v5
  %s7 = scalar_lea.vmem %s2, 8
  %s8 = scalar_lea.vmem %s0, 8
  %v9 = vld [vmem:[%s8] sm:$0xff]
  %10 = vst [vmem:[%s7] sm:$0xff] %v9
  %s11 = scalar_lea.vmem %s2, 16
  %s12 = scalar_lea.vmem %s0, 16
  %v13 = vld [vmem:[%s12] sm:$0xff]
  %14 = vst [vmem:[%s11] sm:$0xff] %v13
  %s15 = scalar_lea.vmem %s2, 24
  %s16 = scalar_lea.vmem %s0, 24
  %v17 = vld [vmem:[%s16] sm:$0xff]
  %18 = vst [vmem:[%s15] sm:$0xff] %v17
  %s19 = scalar_lea.vmem %s2, 32
  %s20 = scalar_lea.vmem %s0, 32
  %v21 = vld [vmem:[%s20] sm:$0xff]
  %22 = vst [vmem:[%s19] sm:$0xff] %v21
  %s23 = scalar_lea.vmem %s2, 40
  %s24 = scalar_lea.vmem %s0, 40
  %v25 = vld [vmem:[%s24] sm:$0xff]
  %26 = vst [vmem:[%s23] sm:$0xff] %v25
  %s27 = scalar_lea.vmem %s2, 48
  %s28 = scalar_lea.vmem %s0, 48
  %v29 = vld [vmem:[%s28] sm:$0xff]
  %30 = vst [vmem:[%s27] sm:$0xff] %v29
  %s31 = scalar_lea.vmem %s2, 56
  %s32 = scalar_lea.vmem %s0, 56
  %v33 = vld [vmem:[%s32] sm:$0xff]
  %34 = vst [vmem:[%s31] sm:$0xff] %v33
  %s35 = scalar_lea.vmem %s2, 64
  %s36 = scalar_lea.vmem %s0, 64
  %v37 = vld [vmem:[%s36] sm:$0xff]
  %38 = vst [vmem:[%s35] sm:$0xff] %v37
  %s39 = scalar_lea.vmem %s2, 72
  %s40 = scalar_lea.vmem %s0, 72
  %v41 = vld [vmem:[%s40] sm:$0xff]
  %42 = vst [vmem:[%s39] sm:$0xff] %v41
  %s43 = scalar_lea.vmem %s2, 80
  %s44 = scalar_lea.vmem %s0, 80
  %v45 = vld [vmem:[%s44] sm:$0xff]
  %46 = vst [vmem:[%s43] sm:$0xff] %v45
  %s47 = scalar_lea.vmem %s2, 88
  %s48 = scalar_lea.vmem %s0, 88
  %v49 = vld [vmem:[%s48] sm:$0xff]
  %50 = vst [vmem:[%s47] sm:$0xff] %v49
  %s51 = scalar_lea.vmem %s2, 96
  %s52 = scalar_lea.vmem %s0, 96
  %v53 = vld [vmem:[%s52] sm:$0xff]
  %54 = vst [vmem:[%s51] sm:$0xff] %v53
  %s55 = scalar_lea.vmem %s2, 104
  %s56 = scalar_lea.vmem %s0, 104
  %v57 = vld [vmem:[%s56] sm:$0xff]
  %58 = vst [vmem:[%s55] sm:$0xff] %v57
  %s59 = scalar_lea.vmem %s2, 112
  %s60 = scalar_lea.vmem %s0, 112
  %v61 = vld [vmem:[%s60] sm:$0xff]
  %62 = vst [vmem:[%s59] sm:$0xff] %v61
  %s63 = scalar_lea.vmem %s2, 120
  %s64 = scalar_lea.vmem %s0, 120
  %v65 = vld [vmem:[%s64] sm:$0xff]
  %66 = vst [vmem:[%s63] sm:$0xff] %v65
  %s67 = scalar_lea.vmem %s2, 128
  %s68 = scalar_lea.vmem %s0, 128
  %v69 = vld [vmem:[%s68] sm:$0xff]
  %70 = vst [vmem:[%s67] sm:$0xff] %v69
  %s71 = scalar_lea.vmem %s2, 136
  %s72 = scalar_lea.vmem %s0, 136
  %v73 = vld [vmem:[%s72] sm:$0xff]
  %74 = vst [vmem:[%s71] sm:$0xff] %v73
  %s75 = scalar_lea.vmem %s2, 144
  %s76 = scalar_lea.vmem %s0, 144
  %v77 = vld [vmem:[%s76] sm:$0xff]
  %78 = vst [vmem:[%s75] sm:$0xff] %v77
  %s79 = scalar_lea.vmem %s2, 152
  %s80 = scalar_lea.vmem %s0, 152
  %v81 = vld [vmem:[%s80] sm:$0xff]
  %82 = vst [vmem:[%s79] sm:$0xff] %v81
  %s83 = scalar_lea.vmem %s2, 160
  %s84 = scalar_lea.vmem %s0, 160
  %v85 = vld [vmem:[%s84] sm:$0xff]
  %86 = vst [vmem:[%s83] sm:$0xff] %v85
  %s87 = scalar_lea.vmem %s2, 168
  %s88 = scalar_lea.vmem %s0, 168
  %v89 = vld [vmem:[%s88] sm:$0xff]
  %90 = vst [vmem:[%s87] sm:$0xff] %v89
  %s91 = scalar_lea.vmem %s2, 176
  %s92 = scalar_lea.vmem %s0, 176
  %v93 = vld [vmem:[%s92] sm:$0xff]
  %94 = vst [vmem:[%s91] sm:$0xff] %v93
  %s95 = scalar_lea.vmem %s2, 184
  %s96 = scalar_lea.vmem %s0, 184
  %v97 = vld [vmem:[%s96] sm:$0xff]
  %98 = vst [vmem:[%s95] sm:$0xff] %v97
  %s99 = scalar_lea.vmem %s2, 192
  %s100 = scalar_lea.vmem %s0, 192
  %v101 = vld [vmem:[%s100] sm:$0xff]
  %102 = vst [vmem:[%s99] sm:$0xff] %v101
  %s103 = scalar_lea.vmem %s2, 200
  %s104 = scalar_lea.vmem %s0, 200
  %v105 = vld [vmem:[%s104] sm:$0xff]
  %106 = vst [vmem:[%s103] sm:$0xff] %v105
  %s107 = scalar_lea.vmem %s2, 208
  %s108 = scalar_lea.vmem %s0, 208
  %v109 = vld [vmem:[%s108] sm:$0xff]
  %110 = vst [vmem:[%s107] sm:$0xff] %v109
  %s111 = scalar_lea.vmem %s2, 216
  %s112 = scalar_lea.vmem %s0, 216
  %v113 = vld [vmem:[%s112] sm:$0xff]
  %114 = vst [vmem:[%s111] sm:$0xff] %v113
  %s115 = scalar_lea.vmem %s2, 224
  %s116 = scalar_lea.vmem %s0, 224
  %v117 = vld [vmem:[%s116] sm:$0xff]
  %118 = vst [vmem:[%s115] sm:$0xff] %v117
  %s119 = scalar_lea.vmem %s2, 232
  %s120 = scalar_lea.vmem %s0, 232
  %v121 = vld [vmem:[%s120] sm:$0xff]
  %122 = vst [vmem:[%s119] sm:$0xff] %v121
  %s123 = scalar_lea.vmem %s2, 240
  %s124 = scalar_lea.vmem %s0, 240
  %v125 = vld [vmem:[%s124] sm:$0xff]
  %126 = vst [vmem:[%s123] sm:$0xff] %v125
  %s127 = scalar_lea.vmem %s2, 248
  %s128 = scalar_lea.vmem %s0, 248
  %v129 = vld [vmem:[%s128] sm:$0xff]
  %130 = vst [vmem:[%s127] sm:$0xff] %v129
  %s131 = scalar_lea.vmem %s2, 256
  %s132 = scalar_lea.vmem %s0, 256
  %v133 = vld [vmem:[%s132] sm:$0xff]
  %134 = vst [vmem:[%s131] sm:$0xff] %v133
  %s135 = scalar_lea.vmem %s2, 264
  %s136 = scalar_lea.vmem %s0, 264
  %v137 = vld [vmem:[%s136] sm:$0xff]
  %138 = vst [vmem:[%s135] sm:$0xff] %v137
  %s139 = scalar_lea.vmem %s2, 272
  %s140 = scalar_lea.vmem %s0, 272
  %v141 = vld [vmem:[%s140] sm:$0xff]
  %142 = vst [vmem:[%s139] sm:$0xff] %v141
  %s143 = scalar_lea.vmem %s2, 280
  %s144 = scalar_lea.vmem %s0, 280
  %v145 = vld [vmem:[%s144] sm:$0xff]
  %146 = vst [vmem:[%s143] sm:$0xff] %v145
  %s147 = scalar_lea.vmem %s2, 288
  %s148 = scalar_lea.vmem %s0, 288
  %v149 = vld [vmem:[%s148] sm:$0xff]
  %150 = vst [vmem:[%s147] sm:$0xff] %v149
  %s151 = scalar_lea.vmem %s2, 296
  %s152 = scalar_lea.vmem %s0, 296
  %v153 = vld [vmem:[%s152] sm:$0xff]
  %154 = vst [vmem:[%s151] sm:$0xff] %v153
  %s155 = scalar_lea.vmem %s2, 304
  %s156 = scalar_lea.vmem %s0, 304
  %v157 = vld [vmem:[%s156] sm:$0xff]
  %158 = vst [vmem:[%s155] sm:$0xff] %v157
  %s159 = scalar_lea.vmem %s2, 312
  %s160 = scalar_lea.vmem %s0, 312
  %v161 = vld [vmem:[%s160] sm:$0xff]
  %162 = vst [vmem:[%s159] sm:$0xff] %v161
  %s163 = scalar_lea.vmem %s2, 320
  %s164 = scalar_lea.vmem %s0, 320
  %v165 = vld [vmem:[%s164] sm:$0xff]
  %166 = vst [vmem:[%s163] sm:$0xff] %v165
  %s167 = scalar_lea.vmem %s2, 328
  %s168 = scalar_lea.vmem %s0, 328
  %v169 = vld [vmem:[%s168] sm:$0xff]
  %170 = vst [vmem:[%s167] sm:$0xff] %v169
  %s171 = scalar_lea.vmem %s2, 336
  %s172 = scalar_lea.vmem %s0, 336
  %v173 = vld [vmem:[%s172] sm:$0xff]
  %174 = vst [vmem:[%s171] sm:$0xff] %v173
  %s175 = scalar_lea.vmem %s2, 344
  %s176 = scalar_lea.vmem %s0, 344
  %v177 = vld [vmem:[%s176] sm:$0xff]
  %178 = vst [vmem:[%s175] sm:$0xff] %v177
  %s179 = scalar_lea.vmem %s2, 352
  %s180 = scalar_lea.vmem %s0, 352
  %v181 = vld [vmem:[%s180] sm:$0xff]
  %182 = vst [vmem:[%s179] sm:$0xff] %v181
  %s183 = scalar_lea.vmem %s2, 360
  %s184 = scalar_lea.vmem %s0, 360
  %v185 = vld [vmem:[%s184] sm:$0xff]
  %186 = vst [vmem:[%s183] sm:$0xff] %v185
  %s187 = scalar_lea.vmem %s2, 368
  %s188 = scalar_lea.vmem %s0, 368
  %v189 = vld [vmem:[%s188] sm:$0xff]
  %190 = vst [vmem:[%s187] sm:$0xff] %v189
  %s191 = scalar_lea.vmem %s2, 376
  %s192 = scalar_lea.vmem %s0, 376
  %v193 = vld [vmem:[%s192] sm:$0xff]
  %194 = vst [vmem:[%s191] sm:$0xff] %v193
  %s195 = scalar_lea.vmem %s2, 384
  %s196 = scalar_lea.vmem %s0, 384
  %v197 = vld [vmem:[%s196] sm:$0xff]
  %198 = vst [vmem:[%s195] sm:$0xff] %v197
  %s199 = scalar_lea.vmem %s2, 392
  %s200 = scalar_lea.vmem %s0, 392
  %v201 = vld [vmem:[%s200] sm:$0xff]
  %202 = vst [vmem:[%s199] sm:$0xff] %v201
  %s203 = scalar_lea.vmem %s2, 400
  %s204 = scalar_lea.vmem %s0, 400
  %v205 = vld [vmem:[%s204] sm:$0xff]
  %206 = vst [vmem:[%s203] sm:$0xff] %v205
  %s207 = scalar_lea.vmem %s2, 408
  %s208 = scalar_lea.vmem %s0, 408
  %v209 = vld [vmem:[%s208] sm:$0xff]
  %210 = vst [vmem:[%s207] sm:$0xff] %v209
  %s211 = scalar_lea.vmem %s2, 416
  %s212 = scalar_lea.vmem %s0, 416
  %v213 = vld [vmem:[%s212] sm:$0xff]
  %214 = vst [vmem:[%s211] sm:$0xff] %v213
  %s215 = scalar_lea.vmem %s2, 424
  %s216 = scalar_lea.vmem %s0, 424
  %v217 = vld [vmem:[%s216] sm:$0xff]
  %218 = vst [vmem:[%s215] sm:$0xff] %v217
  %s219 = scalar_lea.vmem %s2, 432
  %s220 = scalar_lea.vmem %s0, 432
  %v221 = vld [vmem:[%s220] sm:$0xff]
  %222 = vst [vmem:[%s219] sm:$0xff] %v221
  %s223 = scalar_lea.vmem %s2, 440
  %s224 = scalar_lea.vmem %s0, 440
  %v225 = vld [vmem:[%s224] sm:$0xff]
  %226 = vst [vmem:[%s223] sm:$0xff] %v225
  %s227 = scalar_lea.vmem %s2, 448
  %s228 = scalar_lea.vmem %s0, 448
  %v229 = vld [vmem:[%s228] sm:$0xff]
  %230 = vst [vmem:[%s227] sm:$0xff] %v229
  %s231 = scalar_lea.vmem %s2, 456
  %s232 = scalar_lea.vmem %s0, 456
  %v233 = vld [vmem:[%s232] sm:$0xff]
  %234 = vst [vmem:[%s231] sm:$0xff] %v233
  %s235 = scalar_lea.vmem %s2, 464
  %s236 = scalar_lea.vmem %s0, 464
  %v237 = vld [vmem:[%s236] sm:$0xff]
  %238 = vst [vmem:[%s235] sm:$0xff] %v237
  %s239 = scalar_lea.vmem %s2, 472
  %s240 = scalar_lea.vmem %s0, 472
  %v241 = vld [vmem:[%s240] sm:$0xff]
  %242 = vst [vmem:[%s239] sm:$0xff] %v241
  %s243 = scalar_lea.vmem %s2, 480
  %s244 = scalar_lea.vmem %s0, 480
  %v245 = vld [vmem:[%s244] sm:$0xff]
  %246 = vst [vmem:[%s243] sm:$0xff] %v245
  %s247 = scalar_lea.vmem %s2, 488
  %s248 = scalar_lea.vmem %s0, 488
  %v249 = vld [vmem:[%s248] sm:$0xff]
  %250 = vst [vmem:[%s247] sm:$0xff] %v249
  %s251 = scalar_lea.vmem %s2, 496
  %s252 = scalar_lea.vmem %s0, 496
  %v253 = vld [vmem:[%s252] sm:$0xff]
  %254 = vst [vmem:[%s251] sm:$0xff] %v253
  %s255 = scalar_lea.vmem %s2, 504
  %s256 = scalar_lea.vmem %s0, 504
  %v257 = vld [vmem:[%s256] sm:$0xff]
  %258 = vst [vmem:[%s255] sm:$0xff] %v257
  %s259 = scalar_lea.vmem %s2, 512
  %s260 = scalar_lea.vmem %s0, 512
  %v261 = vld [vmem:[%s260] sm:$0xff]
  %262 = vst [vmem:[%s259] sm:$0xff] %v261
  %s263 = scalar_lea.vmem %s2, 520
  %s264 = scalar_lea.vmem %s0, 520
  %v265 = vld [vmem:[%s264] sm:$0xff]
  %266 = vst [vmem:[%s263] sm:$0xff] %v265
  %s267 = scalar_lea.vmem %s2, 528
  %s268 = scalar_lea.vmem %s0, 528
  %v269 = vld [vmem:[%s268] sm:$0xff]
  %270 = vst [vmem:[%s267] sm:$0xff] %v269
  %s271 = scalar_lea.vmem %s2, 536
  %s272 = scalar_lea.vmem %s0, 536
  %v273 = vld [vmem:[%s272] sm:$0xff]
  %274 = vst [vmem:[%s271] sm:$0xff] %v273
  %s275 = scalar_lea.vmem %s2, 544
  %s276 = scalar_lea.vmem %s0, 544
  %v277 = vld [vmem:[%s276] sm:$0xff]
  %278 = vst [vmem:[%s275] sm:$0xff] %v277
  %s279 = scalar_lea.vmem %s2, 552
  %s280 = scalar_lea.vmem %s0, 552
  %v281 = vld [vmem:[%s280] sm:$0xff]
  %282 = vst [vmem:[%s279] sm:$0xff] %v281
  %s283 = scalar_lea.vmem %s2, 560
  %s284 = scalar_lea.vmem %s0, 560
  %v285 = vld [vmem:[%s284] sm:$0xff]
  %286 = vst [vmem:[%s283] sm:$0xff] %v285
  %s287 = scalar_lea.vmem %s2, 568
  %s288 = scalar_lea.vmem %s0, 568
  %v289 = vld [vmem:[%s288] sm:$0xff]
  %290 = vst [vmem:[%s287] sm:$0xff] %v289
  %s291 = scalar_lea.vmem %s2, 576
  %s292 = scalar_lea.vmem %s0, 576
  %v293 = vld [vmem:[%s292] sm:$0xff]
  %294 = vst [vmem:[%s291] sm:$0xff] %v293
  %s295 = scalar_lea.vmem %s2, 584
  %s296 = scalar_lea.vmem %s0, 584
  %v297 = vld [vmem:[%s296] sm:$0xff]
  %298 = vst [vmem:[%s295] sm:$0xff] %v297
  %s299 = scalar_lea.vmem %s2, 592
  %s300 = scalar_lea.vmem %s0, 592
  %v301 = vld [vmem:[%s300] sm:$0xff]
  %302 = vst [vmem:[%s299] sm:$0xff] %v301
  %s303 = scalar_lea.vmem %s2, 600
  %s304 = scalar_lea.vmem %s0, 600
  %v305 = vld [vmem:[%s304] sm:$0xff]
  %306 = vst [vmem:[%s303] sm:$0xff] %v305
  %s307 = scalar_lea.vmem %s2, 608
  %s308 = scalar_lea.vmem %s0, 608
  %v309 = vld [vmem:[%s308] sm:$0xff]
  %310 = vst [vmem:[%s307] sm:$0xff] %v309
  %s311 = scalar_lea.vmem %s2, 616
  %s312 = scalar_lea.vmem %s0, 616
  %v313 = vld [vmem:[%s312] sm:$0xff]
  %314 = vst [vmem:[%s311] sm:$0xff] %v313
  %s315 = scalar_lea.vmem %s2, 624
  %s316 = scalar_lea.vmem %s0, 624
  %v317 = vld [vmem:[%s316] sm:$0xff]
  %318 = vst [vmem:[%s315] sm:$0xff] %v317
  %s319 = scalar_lea.vmem %s2, 632
  %s320 = scalar_lea.vmem %s0, 632
  %v321 = vld [vmem:[%s320] sm:$0xff]
  %322 = vst [vmem:[%s319] sm:$0xff] %v321
  %v323 = vld [vmem:[%s1] sm:$0xff]
  %324 = vst [vmem:[%s4] sm:$0xff] %v323
  %s325 = scalar_lea.vmem %s4, 8
  %s326 = scalar_lea.vmem %s1, 8
  %v327 = vld [vmem:[%s326] sm:$0xff]
  %328 = vst [vmem:[%s325] sm:$0xff] %v327
  %s329 = scalar_lea.vmem %s4, 16
  %s330 = scalar_lea.vmem %s1, 16
  %v331 = vld [vmem:[%s330] sm:$0xff]
  %332 = vst [vmem:[%s329] sm:$0xff] %v331
  %s333 = scalar_lea.vmem %s4, 24
  %s334 = scalar_lea.vmem %s1, 24
  %v335 = vld [vmem:[%s334] sm:$0xff]
  %336 = vst [vmem:[%s333] sm:$0xff] %v335
  %s337 = scalar_lea.vmem %s4, 32
  %s338 = scalar_lea.vmem %s1, 32
  %v339 = vld [vmem:[%s338] sm:$0xff]
  %340 = vst [vmem:[%s337] sm:$0xff] %v339
  %s341 = scalar_lea.vmem %s4, 40
  %s342 = scalar_lea.vmem %s1, 40
  %v343 = vld [vmem:[%s342] sm:$0xff]
  %344 = vst [vmem:[%s341] sm:$0xff] %v343
  %s345 = scalar_lea.vmem %s4, 48
  %s346 = scalar_lea.vmem %s1, 48
  %v347 = vld [vmem:[%s346] sm:$0xff]
  %348 = vst [vmem:[%s345] sm:$0xff] %v347
  %s349 = scalar_lea.vmem %s4, 56
  %s350 = scalar_lea.vmem %s1, 56
  %v351 = vld [vmem:[%s350] sm:$0xff]
  %352 = vst [vmem:[%s349] sm:$0xff] %v351
  %s353 = scalar_lea.vmem %s4, 64
  %s354 = scalar_lea.vmem %s1, 64
  %v355 = vld [vmem:[%s354] sm:$0xff]
  %356 = vst [vmem:[%s353] sm:$0xff] %v355
  %s357 = scalar_lea.vmem %s4, 72
  %s358 = scalar_lea.vmem %s1, 72
  %v359 = vld [vmem:[%s358] sm:$0xff]
  %360 = vst [vmem:[%s357] sm:$0xff] %v359
  %s361 = scalar_lea.vmem %s4, 80
  %s362 = scalar_lea.vmem %s1, 80
  %v363 = vld [vmem:[%s362] sm:$0xff]
  %364 = vst [vmem:[%s361] sm:$0xff] %v363
  %s365 = scalar_lea.vmem %s4, 88
  %s366 = scalar_lea.vmem %s1, 88
  %v367 = vld [vmem:[%s366] sm:$0xff]
  %368 = vst [vmem:[%s365] sm:$0xff] %v367
  %s369 = scalar_lea.vmem %s4, 96
  %s370 = scalar_lea.vmem %s1, 96
  %v371 = vld [vmem:[%s370] sm:$0xff]
  %372 = vst [vmem:[%s369] sm:$0xff] %v371
  %s373 = scalar_lea.vmem %s4, 104
  %s374 = scalar_lea.vmem %s1, 104
  %v375 = vld [vmem:[%s374] sm:$0xff]
  %376 = vst [vmem:[%s373] sm:$0xff] %v375
  %s377 = scalar_lea.vmem %s4, 112
  %s378 = scalar_lea.vmem %s1, 112
  %v379 = vld [vmem:[%s378] sm:$0xff]
  %380 = vst [vmem:[%s377] sm:$0xff] %v379
  %s381 = scalar_lea.vmem %s4, 120
  %s382 = scalar_lea.vmem %s1, 120
  %v383 = vld [vmem:[%s382] sm:$0xff]
  %384 = vst [vmem:[%s381] sm:$0xff] %v383
  %s385 = scalar_lea.vmem %s4, 128
  %s386 = scalar_lea.vmem %s1, 128
  %v387 = vld [vmem:[%s386] sm:$0xff]
  %388 = vst [vmem:[%s385] sm:$0xff] %v387
  %s389 = scalar_lea.vmem %s4, 136
  %s390 = scalar_lea.vmem %s1, 136
  %v391 = vld [vmem:[%s390] sm:$0xff]
  %392 = vst [vmem:[%s389] sm:$0xff] %v391
  %s393 = scalar_lea.vmem %s4, 144
  %s394 = scalar_lea.vmem %s1, 144
  %v395 = vld [vmem:[%s394] sm:$0xff]
  %396 = vst [vmem:[%s393] sm:$0xff] %v395
  %s397 = scalar_lea.vmem %s4, 152
  %s398 = scalar_lea.vmem %s1, 152
  %v399 = vld [vmem:[%s398] sm:$0xff]
  %400 = vst [vmem:[%s397] sm:$0xff] %v399
  %s401 = scalar_lea.vmem %s4, 160
  %s402 = scalar_lea.vmem %s1, 160
  %v403 = vld [vmem:[%s402] sm:$0xff]
  %404 = vst [vmem:[%s401] sm:$0xff] %v403
  %s405 = scalar_lea.vmem %s4, 168
  %s406 = scalar_lea.vmem %s1, 168
  %v407 = vld [vmem:[%s406] sm:$0xff]
  %408 = vst [vmem:[%s405] sm:$0xff] %v407
  %s409 = scalar_lea.vmem %s4, 176
  %s410 = scalar_lea.vmem %s1, 176
  %v411 = vld [vmem:[%s410] sm:$0xff]
  %412 = vst [vmem:[%s409] sm:$0xff] %v411
  %s413 = scalar_lea.vmem %s4, 184
  %s414 = scalar_lea.vmem %s1, 184
  %v415 = vld [vmem:[%s414] sm:$0xff]
  %416 = vst [vmem:[%s413] sm:$0xff] %v415
  %s417 = scalar_lea.vmem %s4, 192
  %s418 = scalar_lea.vmem %s1, 192
  %v419 = vld [vmem:[%s418] sm:$0xff]
  %420 = vst [vmem:[%s417] sm:$0xff] %v419
  %s421 = scalar_lea.vmem %s4, 200
  %s422 = scalar_lea.vmem %s1, 200
  %v423 = vld [vmem:[%s422] sm:$0xff]
  %424 = vst [vmem:[%s421] sm:$0xff] %v423
  %s425 = scalar_lea.vmem %s4, 208
  %s426 = scalar_lea.vmem %s1, 208
  %v427 = vld [vmem:[%s426] sm:$0xff]
  %428 = vst [vmem:[%s425] sm:$0xff] %v427
  %s429 = scalar_lea.vmem %s4, 216
  %s430 = scalar_lea.vmem %s1, 216
  %v431 = vld [vmem:[%s430] sm:$0xff]
  %432 = vst [vmem:[%s429] sm:$0xff] %v431
  %s433 = scalar_lea.vmem %s4, 224
  %s434 = scalar_lea.vmem %s1, 224
  %v435 = vld [vmem:[%s434] sm:$0xff]
  %436 = vst [vmem:[%s433] sm:$0xff] %v435
  %s437 = scalar_lea.vmem %s4, 232
  %s438 = scalar_lea.vmem %s1, 232
  %v439 = vld [vmem:[%s438] sm:$0xff]
  %440 = vst [vmem:[%s437] sm:$0xff] %v439
  %s441 = scalar_lea.vmem %s4, 240
  %s442 = scalar_lea.vmem %s1, 240
  %v443 = vld [vmem:[%s442] sm:$0xff]
  %444 = vst [vmem:[%s441] sm:$0xff] %v443
  %s445 = scalar_lea.vmem %s4, 248
  %s446 = scalar_lea.vmem %s1, 248
  %v447 = vld [vmem:[%s446] sm:$0xff]
  %448 = vst [vmem:[%s445] sm:$0xff] %v447
  %s449 = scalar_lea.vmem %s4, 256
  %s450 = scalar_lea.vmem %s1, 256
  %v451 = vld [vmem:[%s450] sm:$0xff]
  %452 = vst [vmem:[%s449] sm:$0xff] %v451
  %s453 = scalar_lea.vmem %s4, 264
  %s454 = scalar_lea.vmem %s1, 264
  %v455 = vld [vmem:[%s454] sm:$0xff]
  %456 = vst [vmem:[%s453] sm:$0xff] %v455
  %s457 = scalar_lea.vmem %s4, 272
  %s458 = scalar_lea.vmem %s1, 272
  %v459 = vld [vmem:[%s458] sm:$0xff]
  %460 = vst [vmem:[%s457] sm:$0xff] %v459
  %s461 = scalar_lea.vmem %s4, 280
  %s462 = scalar_lea.vmem %s1, 280
  %v463 = vld [vmem:[%s462] sm:$0xff]
  %464 = vst [vmem:[%s461] sm:$0xff] %v463
  %s465 = scalar_lea.vmem %s4, 288
  %s466 = scalar_lea.vmem %s1, 288
  %v467 = vld [vmem:[%s466] sm:$0xff]
  %468 = vst [vmem:[%s465] sm:$0xff] %v467
  %s469 = scalar_lea.vmem %s4, 296
  %s470 = scalar_lea.vmem %s1, 296
  %v471 = vld [vmem:[%s470] sm:$0xff]
  %472 = vst [vmem:[%s469] sm:$0xff] %v471
  %s473 = scalar_lea.vmem %s4, 304
  %s474 = scalar_lea.vmem %s1, 304
  %v475 = vld [vmem:[%s474] sm:$0xff]
  %476 = vst [vmem:[%s473] sm:$0xff] %v475
  %s477 = scalar_lea.vmem %s4, 312
  %s478 = scalar_lea.vmem %s1, 312
  %v479 = vld [vmem:[%s478] sm:$0xff]
  %480 = vst [vmem:[%s477] sm:$0xff] %v479
  %s481 = scalar_lea.vmem %s4, 320
  %s482 = scalar_lea.vmem %s1, 320
  %v483 = vld [vmem:[%s482] sm:$0xff]
  %484 = vst [vmem:[%s481] sm:$0xff] %v483
  %s485 = scalar_lea.vmem %s4, 328
  %s486 = scalar_lea.vmem %s1, 328
  %v487 = vld [vmem:[%s486] sm:$0xff]
  %488 = vst [vmem:[%s485] sm:$0xff] %v487
  %s489 = scalar_lea.vmem %s4, 336
  %s490 = scalar_lea.vmem %s1, 336
  %v491 = vld [vmem:[%s490] sm:$0xff]
  %492 = vst [vmem:[%s489] sm:$0xff] %v491
  %s493 = scalar_lea.vmem %s4, 344
  %s494 = scalar_lea.vmem %s1, 344
  %v495 = vld [vmem:[%s494] sm:$0xff]
  %496 = vst [vmem:[%s493] sm:$0xff] %v495
  %s497 = scalar_lea.vmem %s4, 352
  %s498 = scalar_lea.vmem %s1, 352
  %v499 = vld [vmem:[%s498] sm:$0xff]
  %500 = vst [vmem:[%s497] sm:$0xff] %v499
  %s501 = scalar_lea.vmem %s4, 360
  %s502 = scalar_lea.vmem %s1, 360
  %v503 = vld [vmem:[%s502] sm:$0xff]
  %504 = vst [vmem:[%s501] sm:$0xff] %v503
  %s505 = scalar_lea.vmem %s4, 368
  %s506 = scalar_lea.vmem %s1, 368
  %v507 = vld [vmem:[%s506] sm:$0xff]
  %508 = vst [vmem:[%s505] sm:$0xff] %v507
  %s509 = scalar_lea.vmem %s4, 376
  %s510 = scalar_lea.vmem %s1, 376
  %v511 = vld [vmem:[%s510] sm:$0xff]
  %512 = vst [vmem:[%s509] sm:$0xff] %v511
  %s513 = scalar_lea.vmem %s4, 384
  %s514 = scalar_lea.vmem %s1, 384
  %v515 = vld [vmem:[%s514] sm:$0xff]
  %516 = vst [vmem:[%s513] sm:$0xff] %v515
  %s517 = scalar_lea.vmem %s4, 392
  %s518 = scalar_lea.vmem %s1, 392
  %v519 = vld [vmem:[%s518] sm:$0xff]
  %520 = vst [vmem:[%s517] sm:$0xff] %v519
  %s521 = scalar_lea.vmem %s4, 400
  %s522 = scalar_lea.vmem %s1, 400
  %v523 = vld [vmem:[%s522] sm:$0xff]
  %524 = vst [vmem:[%s521] sm:$0xff] %v523
  %s525 = scalar_lea.vmem %s4, 408
  %s526 = scalar_lea.vmem %s1, 408
  %v527 = vld [vmem:[%s526] sm:$0xff]
  %528 = vst [vmem:[%s525] sm:$0xff] %v527
  %s529 = scalar_lea.vmem %s4, 416
  %s530 = scalar_lea.vmem %s1, 416
  %v531 = vld [vmem:[%s530] sm:$0xff]
  %532 = vst [vmem:[%s529] sm:$0xff] %v531
  %s533 = scalar_lea.vmem %s4, 424
  %s534 = scalar_lea.vmem %s1, 424
  %v535 = vld [vmem:[%s534] sm:$0xff]
  %536 = vst [vmem:[%s533] sm:$0xff] %v535
  %s537 = scalar_lea.vmem %s4, 432
  %s538 = scalar_lea.vmem %s1, 432
  %v539 = vld [vmem:[%s538] sm:$0xff]
  %540 = vst [vmem:[%s537] sm:$0xff] %v539
  %s541 = scalar_lea.vmem %s4, 440
  %s542 = scalar_lea.vmem %s1, 440
  %v543 = vld [vmem:[%s542] sm:$0xff]
  %544 = vst [vmem:[%s541] sm:$0xff] %v543
  %s545 = scalar_lea.vmem %s4, 448
  %s546 = scalar_lea.vmem %s1, 448
  %v547 = vld [vmem:[%s546] sm:$0xff]
  %548 = vst [vmem:[%s545] sm:$0xff] %v547
  %s549 = scalar_lea.vmem %s4, 456
  %s550 = scalar_lea.vmem %s1, 456
  %v551 = vld [vmem:[%s550] sm:$0xff]
  %552 = vst [vmem:[%s549] sm:$0xff] %v551
  %s553 = scalar_lea.vmem %s4, 464
  %s554 = scalar_lea.vmem %s1, 464
  %v555 = vld [vmem:[%s554] sm:$0xff]
  %556 = vst [vmem:[%s553] sm:$0xff] %v555
  %s557 = scalar_lea.vmem %s4, 472
  %s558 = scalar_lea.vmem %s1, 472
  %v559 = vld [vmem:[%s558] sm:$0xff]
  %560 = vst [vmem:[%s557] sm:$0xff] %v559
  %s561 = scalar_lea.vmem %s4, 480
  %s562 = scalar_lea.vmem %s1, 480
  %v563 = vld [vmem:[%s562] sm:$0xff]
  %564 = vst [vmem:[%s561] sm:$0xff] %v563
  %s565 = scalar_lea.vmem %s4, 488
  %s566 = scalar_lea.vmem %s1, 488
  %v567 = vld [vmem:[%s566] sm:$0xff]
  %568 = vst [vmem:[%s565] sm:$0xff] %v567
  %s569 = scalar_lea.vmem %s4, 496
  %s570 = scalar_lea.vmem %s1, 496
  %v571 = vld [vmem:[%s570] sm:$0xff]
  %572 = vst [vmem:[%s569] sm:$0xff] %v571
  %s573 = scalar_lea.vmem %s4, 504
  %s574 = scalar_lea.vmem %s1, 504
  %v575 = vld [vmem:[%s574] sm:$0xff]
  %576 = vst [vmem:[%s573] sm:$0xff] %v575
  %s577 = scalar_lea.vmem %s4, 512
  %s578 = scalar_lea.vmem %s1, 512
  %v579 = vld [vmem:[%s578] sm:$0xff]
  %580 = vst [vmem:[%s577] sm:$0xff] %v579
  %s581 = scalar_lea.vmem %s4, 520
  %s582 = scalar_lea.vmem %s1, 520
  %v583 = vld [vmem:[%s582] sm:$0xff]
  %584 = vst [vmem:[%s581] sm:$0xff] %v583
  %s585 = scalar_lea.vmem %s4, 528
  %s586 = scalar_lea.vmem %s1, 528
  %v587 = vld [vmem:[%s586] sm:$0xff]
  %588 = vst [vmem:[%s585] sm:$0xff] %v587
  %s589 = scalar_lea.vmem %s4, 536
  %s590 = scalar_lea.vmem %s1, 536
  %v591 = vld [vmem:[%s590] sm:$0xff]
  %592 = vst [vmem:[%s589] sm:$0xff] %v591
  %s593 = scalar_lea.vmem %s4, 544
  %s594 = scalar_lea.vmem %s1, 544
  %v595 = vld [vmem:[%s594] sm:$0xff]
  %596 = vst [vmem:[%s593] sm:$0xff] %v595
  %s597 = scalar_lea.vmem %s4, 552
  %s598 = scalar_lea.vmem %s1, 552
  %v599 = vld [vmem:[%s598] sm:$0xff]
  %600 = vst [vmem:[%s597] sm:$0xff] %v599
  %s601 = scalar_lea.vmem %s4, 560
  %s602 = scalar_lea.vmem %s1, 560
  %v603 = vld [vmem:[%s602] sm:$0xff]
  %604 = vst [vmem:[%s601] sm:$0xff] %v603
  %s605 = scalar_lea.vmem %s4, 568
  %s606 = scalar_lea.vmem %s1, 568
  %v607 = vld [vmem:[%s606] sm:$0xff]
  %608 = vst [vmem:[%s605] sm:$0xff] %v607
  %s609 = scalar_lea.vmem %s4, 576
  %s610 = scalar_lea.vmem %s1, 576
  %v611 = vld [vmem:[%s610] sm:$0xff]
  %612 = vst [vmem:[%s609] sm:$0xff] %v611
  %s613 = scalar_lea.vmem %s4, 584
  %s614 = scalar_lea.vmem %s1, 584
  %v615 = vld [vmem:[%s614] sm:$0xff]
  %616 = vst [vmem:[%s613] sm:$0xff] %v615
  %s617 = scalar_lea.vmem %s4, 592
  %s618 = scalar_lea.vmem %s1, 592
  %v619 = vld [vmem:[%s618] sm:$0xff]
  %620 = vst [vmem:[%s617] sm:$0xff] %v619
  %s621 = scalar_lea.vmem %s4, 600
  %s622 = scalar_lea.vmem %s1, 600
  %v623 = vld [vmem:[%s622] sm:$0xff]
  %624 = vst [vmem:[%s621] sm:$0xff] %v623
  %s625 = scalar_lea.vmem %s4, 608
  %s626 = scalar_lea.vmem %s1, 608
  %v627 = vld [vmem:[%s626] sm:$0xff]
  %628 = vst [vmem:[%s625] sm:$0xff] %v627
  %s629 = scalar_lea.vmem %s4, 616
  %s630 = scalar_lea.vmem %s1, 616
  %v631 = vld [vmem:[%s630] sm:$0xff]
  %632 = vst [vmem:[%s629] sm:$0xff] %v631
  %s633 = scalar_lea.vmem %s4, 624
  %s634 = scalar_lea.vmem %s1, 624
  %v635 = vld [vmem:[%s634] sm:$0xff]
  %636 = vst [vmem:[%s633] sm:$0xff] %v635
  %s637 = scalar_lea.vmem %s4, 632
  %s638 = scalar_lea.vmem %s1, 632
  %v639 = vld [vmem:[%s638] sm:$0xff]
  %640 = vst [vmem:[%s637] sm:$0xff] %v639

</llo_original>
